<compile_context>
chip_gen: v6e
topology: v6e:2x2x1
jax: 0.10.0
libtpu: 0.0.40
codegen_flags: <defaults>
</compile_context>

<pallas_src>
import functools
import math

import jax
import jax.numpy as jnp
from jax import lax
from jax.experimental import pallas as pl
from jax.experimental.pallas import tpu as pltpu

_VMEM_BUDGET = 48 * 1024 * 1024  # bytes: safe on v7x (64 MiB), raises v5e's 16 MiB default


def _round_up(x, m):
    return (x + m - 1) // m * m


def _embedfc_kernel(x_ref, w1_ref, b1_ref, w2_ref, b2_ref, o_ref, *, mxu_bf16):
    x = x_ref[...]                                        # (tm, K)
    w1 = w1_ref[...]                                      # (K, E)
    w2 = w2_ref[...]                                      # (E, E)
    if mxu_bf16:
        x = x.astype(jnp.bfloat16)
        w1 = w1.astype(jnp.bfloat16)
        w2 = w2.astype(jnp.bfloat16)

    # fc1: x @ W1 + b1 (MXU, f32 accumulation)
    h = jnp.dot(x, w1, preferred_element_type=jnp.float32)
    h = h + b1_ref[...].astype(jnp.float32)               # broadcast (1, E)

    # Exact erf-based GELU (matches torch.nn.GELU default); erf runs on the EUP.
    h = 0.5 * h * (1.0 + lax.erf(h * jnp.float32(0.7071067811865476)))

    # fc2: h @ W2 + b2 — keep h in f32 unless the bf16 MXU path is requested.
    h2 = h.astype(jnp.bfloat16) if mxu_bf16 else h
    o = jnp.dot(h2, w2, preferred_element_type=jnp.float32)
    o = o + b2_ref[...].astype(jnp.float32)

    o_ref[...] = o.astype(o_ref.dtype)


def _pick_row_tile(n, k, e, in_bytes, out_bytes, w_bytes, row_tile):
    """Sublane-aligned row tile, >=2 grid steps when possible, fit to VMEM budget."""
    sub = max(8, 32 // in_bytes)          # 8 rows f32 / 16 bf16 / 32 int8 per sublane tile
    if n <= sub:
        return n                          # one full-extent block (equals array dim -> legal)
    # Aim for at least 2 row tiles so both v7x TensorCores get work.
    tm = max(sub, min(row_tile, _round_up((n + 1) // 2, sub)))
    resident = (k * e + e * e + 2 * e) * w_bytes          # single-buffered params

    def tile_bytes(t):                    # double-buffered x/out tiles + f32 hidden scratch
        return 2 * t * k * in_bytes + 2 * t * e * out_bytes + 2 * t * e * 4

    while tm > sub and resident + tile_bytes(tm) > _VMEM_BUDGET:
        tm = max(sub, _round_up(tm // 2, sub))
    return tm


def embed_fc(x, w1, b1, w2, b2, input_dim, *, row_tile=512, mxu_bf16=False):
    """Fused Linear -> GELU -> Linear.

    x:  any shape whose total size is N*input_dim (like torch .view(-1, input_dim)).
    w1: (input_dim, emb_dim)   b1: (emb_dim,)    [weights stored (in, out): y = x @ W + b]
    w2: (emb_dim, emb_dim)     b2: (emb_dim,)
    """
    x2d = x.reshape(-1, input_dim)                        # == torch .view(-1, input_dim)
    n = x2d.shape[0]
    emb_dim = w1.shape[1]
    out_dtype = jnp.result_type(x.dtype, w1.dtype)

    b1_2d = b1.reshape(1, emb_dim)
    b2_2d = b2.reshape(1, emb_dim)

    in_bytes = jnp.dtype(x2d.dtype).itemsize
    out_bytes = jnp.dtype(out_dtype).itemsize
    w_bytes = jnp.dtype(w1.dtype).itemsize
    tm = _pick_row_tile(n, input_dim, emb_dim, in_bytes, out_bytes, w_bytes, row_tile)
    grid = (pl.cdiv(n, tm),)                              # last block partial, Pallas masks it

    resident = pl.Buffered(1)   # constant index_map -> no point double-buffering the params

    cost = pl.CostEstimate(
        flops=2 * n * (input_dim * emb_dim + emb_dim * emb_dim),
        transcendentals=n * emb_dim,                      # one erf per hidden element
        bytes_accessed=(n * input_dim * in_bytes
                        + (input_dim * emb_dim + emb_dim * emb_dim + 2 * emb_dim) * w_bytes
                        + n * emb_dim * out_bytes),
    )

    kernel = functools.partial(_embedfc_kernel, mxu_bf16=mxu_bf16)

    return pl.pallas_call(
        kernel,
        out_shape=jax.ShapeDtypeStruct((n, emb_dim), out_dtype),
        grid_spec=pltpu.PrefetchScalarGridSpec(
            num_scalar_prefetch=0,
            grid=grid,
            in_specs=[
                # x tile marches down the rows; params stay VMEM-resident.
                pl.BlockSpec((tm, input_dim), lambda i: (i, 0)),
                pl.BlockSpec((input_dim, emb_dim), lambda i: (0, 0), pipeline_mode=resident),
                pl.BlockSpec((1, emb_dim), lambda i: (0, 0), pipeline_mode=resident),
                pl.BlockSpec((emb_dim, emb_dim), lambda i: (0, 0), pipeline_mode=resident),
                pl.BlockSpec((1, emb_dim), lambda i: (0, 0), pipeline_mode=resident),
            ],
            out_specs=pl.BlockSpec((tm, emb_dim), lambda i: (i, 0)),
        ),
        compiler_params=pltpu.CompilerParams(
            dimension_semantics=("parallel",),            # row tiles shard across v7x's 2 TCs
            vmem_limit_bytes=_VMEM_BUDGET,
        ),
        cost_estimate=cost,
    )(x2d, w1, b1_2d, w2, b2_2d)


def _reference(x, w1, b1, w2, b2, input_dim):
    x2d = x.reshape(-1, input_dim).astype(jnp.float32)
    h = x2d @ w1.astype(jnp.float32) + b1.astype(jnp.float32)
    h = 0.5 * h * (1.0 + lax.erf(h / jnp.sqrt(jnp.float32(2.0))))
    return h @ w2.astype(jnp.float32) + b2.astype(jnp.float32)


if __name__ == "__main__":
    # Shapes consistent with the module: x (2, 4, 16, 16) flattened to
    # (-1, input_dim) with input_dim = 64 -> N = 128 rows; emb_dim = 32.
    input_dim = 64
    emb_dim = 32

    key = jax.random.PRNGKey(0)
    kx, kw1, kb1, kw2, kb2 = jax.random.split(key, 5)

    x = jax.random.normal(kx, (2, 4, 16, 16), dtype=jnp.float32)

    # Deterministic init mimicking nn.Linear's uniform(-1/sqrt(fan_in), 1/sqrt(fan_in)).
    bound1 = 1.0 / math.sqrt(input_dim)
    bound2 = 1.0 / math.sqrt(emb_dim)
    # Weights stored as (in_features, out_features) — transposed vs. PyTorch storage.
    w1 = jax.random.uniform(kw1, (input_dim, emb_dim), jnp.float32, -bound1, bound1)
    b1 = jax.random.uniform(kb1, (emb_dim,), jnp.float32, -bound1, bound1)
    w2 = jax.random.uniform(kw2, (emb_dim, emb_dim), jnp.float32, -bound2, bound2)
    b2 = jax.random.uniform(kb2, (emb_dim,), jnp.float32, -bound2, bound2)

    out = embed_fc(x, w1, b1, w2, b2, input_dim)
    out = jax.block_until_ready(out)

    ref = _reference(x, w1, b1, w2, b2, input_dim)
    n_rows = x.size // input_dim
    assert out.shape == (n_rows, emb_dim), out.shape
    assert jnp.allclose(out, ref, atol=1e-4, rtol=1e-4), \
        float(jnp.max(jnp.abs(out - ref)))

    print("KERNEL_OK")
</pallas_src>

<mosaic_0001>
module attributes {stable_mosaic.version = 11 : i64} {
  func.func @_embedfc_kernel(%arg0: i32, %arg1: memref<16x64xf32, #tpu.memory_space<vmem>>, %arg2: memref<64x32xf32, #tpu.memory_space<vmem>>, %arg3: memref<1x32xf32, #tpu.memory_space<vmem>>, %arg4: memref<32x32xf32, #tpu.memory_space<vmem>>, %arg5: memref<1x32xf32, #tpu.memory_space<vmem>>, %arg6: memref<16x32xf32, #tpu.memory_space<vmem>>) attributes {dimension_semantics = [#tpu.dimension_semantics<parallel>], iteration_bounds = array<i64: 2>, scalar_prefetch = 0 : i64, scratch_operands = 0 : i64, tpu.core_type = #tpu.core_type<tc>, window_params = [{transform_indices = @transform_0, window_bounds = array<i64: 16, 64>}, {pipeline_mode = #tpu.pipeline_mode<synchronous>, transform_indices = @transform_1, window_bounds = array<i64: 64, 32>}, {pipeline_mode = #tpu.pipeline_mode<synchronous>, transform_indices = @transform_2, window_bounds = array<i64: 1, 32>}, {pipeline_mode = #tpu.pipeline_mode<synchronous>, transform_indices = @transform_3, window_bounds = array<i64: 32, 32>}, {pipeline_mode = #tpu.pipeline_mode<synchronous>, transform_indices = @transform_4, window_bounds = array<i64: 1, 32>}, {transform_indices = @transform_5, window_bounds = array<i64: 16, 32>}]} {
    %c0 = arith.constant 0 : index
    %c0_0 = arith.constant 0 : index
    %0 = vector.load %arg1[%c0, %c0_0] : memref<16x64xf32, #tpu.memory_space<vmem>>, vector<16x64xf32>
    %c0_1 = arith.constant 0 : index
    %c0_2 = arith.constant 0 : index
    %1 = vector.load %arg2[%c0_1, %c0_2] : memref<64x32xf32, #tpu.memory_space<vmem>>, vector<64x32xf32>
    %c0_3 = arith.constant 0 : index
    %c0_4 = arith.constant 0 : index
    %2 = vector.load %arg4[%c0_3, %c0_4] : memref<32x32xf32, #tpu.memory_space<vmem>>, vector<32x32xf32>
    %cst = arith.constant dense<0.000000e+00> : vector<16x32xf32>
    %3 = tpu.matmul %0, %1, %cst {dimension_numbers = #tpu.dot_dimension_numbers<[1], [0], [0], [1], [0, 0, 1, 1], [], []>} : vector<16x64xf32>, vector<64x32xf32>, vector<16x32xf32> -> vector<16x32xf32>
    %c0_5 = arith.constant 0 : index
    %c0_6 = arith.constant 0 : index
    %4 = vector.load %arg3[%c0_5, %c0_6] : memref<1x32xf32, #tpu.memory_space<vmem>>, vector<1x32xf32>
    %5 = vector.broadcast %4 : vector<1x32xf32> to vector<16x32xf32>
    %6 = arith.addf %3, %5 : vector<16x32xf32>
    %cst_7 = arith.constant 5.000000e-01 : f32
    %7 = vector.broadcast %cst_7 : f32 to vector<16x32xf32>
    %8 = arith.mulf %7, %6 : vector<16x32xf32>
    %cst_8 = arith.constant 0.707106769 : f32
    %9 = vector.broadcast %cst_8 : f32 to vector<16x32xf32>
    %10 = arith.mulf %6, %9 : vector<16x32xf32>
    %11 = math.erf %10 : vector<16x32xf32>
    %cst_9 = arith.constant 1.000000e+00 : f32
    %12 = vector.broadcast %cst_9 : f32 to vector<16x32xf32>
    %13 = arith.addf %12, %11 : vector<16x32xf32>
    %14 = arith.mulf %8, %13 : vector<16x32xf32>
    %cst_10 = arith.constant dense<0.000000e+00> : vector<16x32xf32>
    %15 = tpu.matmul %14, %2, %cst_10 {dimension_numbers = #tpu.dot_dimension_numbers<[1], [0], [0], [1], [0, 0, 1, 1], [], []>} : vector<16x32xf32>, vector<32x32xf32>, vector<16x32xf32> -> vector<16x32xf32>
    %c0_11 = arith.constant 0 : index
    %c0_12 = arith.constant 0 : index
    %16 = vector.load %arg5[%c0_11, %c0_12] : memref<1x32xf32, #tpu.memory_space<vmem>>, vector<1x32xf32>
    %17 = vector.broadcast %16 : vector<1x32xf32> to vector<16x32xf32>
    %18 = arith.addf %15, %17 : vector<16x32xf32>
    %c0_13 = arith.constant 0 : index
    %c0_14 = arith.constant 0 : index
    %19 = vector.load %arg6[%c0_13, %c0_14] : memref<16x32xf32, #tpu.memory_space<vmem>>, vector<16x32xf32>
    tpu.vector_store %arg6[%c0_13, %c0_14], %18 {strides = array<i32>} : memref<16x32xf32, #tpu.memory_space<vmem>>, vector<16x32xf32>,
    return
  }
  func.func @transform_0(%arg0: i32) -> (i32, i32) {
    %c0_i32 = arith.constant 0 : i32
    %c0_i32_0 = arith.constant 0 : i32
    return %arg0, %c0_i32 : i32, i32
  }
  func.func @transform_1(%arg0: i32) -> (i32, i32) {
    %c0_i32 = arith.constant 0 : i32
    %c0_i32_0 = arith.constant 0 : i32
    %c0_i32_1 = arith.constant 0 : i32
    return %c0_i32, %c0_i32_0 : i32, i32
  }
  func.func @transform_2(%arg0: i32) -> (i32, i32) {
    %c0_i32 = arith.constant 0 : i32
    %c0_i32_0 = arith.constant 0 : i32
    %c0_i32_1 = arith.constant 0 : i32
    return %c0_i32, %c0_i32_0 : i32, i32
  }
  func.func @transform_3(%arg0: i32) -> (i32, i32) {
    %c0_i32 = arith.constant 0 : i32
    %c0_i32_0 = arith.constant 0 : i32
    %c0_i32_1 = arith.constant 0 : i32
    return %c0_i32, %c0_i32_0 : i32, i32
  }
  func.func @transform_4(%arg0: i32) -> (i32, i32) {
    %c0_i32 = arith.constant 0 : i32
    %c0_i32_0 = arith.constant 0 : i32
    %c0_i32_1 = arith.constant 0 : i32
    return %c0_i32, %c0_i32_0 : i32, i32
  }
  func.func @transform_5(%arg0: i32) -> (i32, i32) {
    %c0_i32 = arith.constant 0 : i32
    %c0_i32_0 = arith.constant 0 : i32
    return %arg0, %c0_i32 : i32, i32
  }
}

</mosaic_0001>

<llo_original>
// kernel: tpu_custom_call.1
$region0: #{tpu_custom_call.1}
  #allocation0 [shape = 'u32[]', space=smem, size = 0x4, offset = 0x4, fixed_abs, tag = 'smem constant byte address 0x4 - core index']
  #allocation1 [shape = 'u32[144,128]{1,0:T(1,128)}', space=vmem, size = 0x12000, scoped, tag = 'internal scratch']
  %s0 = inlined_call_operand.vmem [shape: f32[32,64], index: 0, kind: input, shape index: {}]
  %s1 = inlined_call_operand.vmem [shape: f32[64,32], index: 1, kind: input, shape index: {}]
  %s2 = inlined_call_operand.vmem [shape: f32[1,32], index: 2, kind: input, shape index: {}]
  %s3 = inlined_call_operand.vmem [shape: f32[32,32], index: 3, kind: input, shape index: {}]
  %s4 = inlined_call_operand.vmem [shape: f32[1,32], index: 4, kind: input, shape index: {}]
  %s5 = inlined_call_operand.hbm [shape: f32[32,32], index: 5, kind: output, shape index: {}]
  %s6 = sld [smem:[#allocation0]]
  $region53: #{tpu_custom_call.1} parent=0
    _
  %s8 = ssub.s32 1, %s6
  %s9 = scalar_select 0, %s8, %s6
  $region1: #{tpu_custom_call.1} parent=0
    #allocation2 [shape = 'u8[16384]{0}', space=vmem, size = 0x4000, scoped, tag = 'output window, operand 0']
    #allocation3 [shape = 's32[2]{0}', space=sflag, size = 0x8, scoped, tag = 'scoped memory for tpu_custom_call.1']
    %10 = vsyncpa [#allocation3], 0
    %s11 = scalar_lea.sflag [#allocation3], 1
    %12 = vsyncpa %s11, 0
    loop: start=0, step=1, limit=4
    $region2: #{tpu_custom_call.1} parent=1 // loop_pre_header
      _
    $region3: #{tpu_custom_call.1} parent=1 // loop_header
      %s14 = sphi 0, %s18
      %p15 = scmp.ge.s32.totalorder %s14, 4
      %s24 = sphi 0, %s26
      %s27 = sphi 0, %s24
      %s28 = sphi 0, %s27
      %s44 = sphi 0, %s28
      %s48 = sphi 0, %s48
      %s50 = sphi 0, %s48
      %s51 = sphi 0, %s50
      %s65 = sphi 0, %s51
      %s69 = sphi 0, %s69
      %s71 = sphi 0, %s69
      %s72 = sphi 0, %s71
      %s86 = sphi 0, %s72
      %s90 = sphi 0, %s90
      %s92 = sphi 0, %s90
      %s93 = sphi 0, %s92
      %s107 = sphi 0, %s93
      %s111 = sphi 0, %s111
      %s113 = sphi 0, %s111
      %s114 = sphi 0, %s113
      %s128 = sphi 0, %s114
      %s134 = sphi 0, %s136
      %s137 = sphi 0, %s134
      %s138 = sphi 0, %s137
      %s154 = sphi 0, %s138
    $region4: #{tpu_custom_call.1} parent=1 // loop_header_branch
      %17 = sbr.rel (%p15) target = $region8
    $region5: #{tpu_custom_call.1} parent=1 // loop_body
      %s19 = ssub.s32 %s14, 1
      %s20 = ssub.s32 %s14, 2
      %s21 = sadd.s32 %s14, 1
      %s22 = ssub.s32 %s14, %s21
      %p23 = scmp.eq.s32.totalorder %s22, 0
      %s25 = sadd.s32 %s24, 1
      %s26 = scalar_select %p23, %s24, %s25
      %p29 = pneg %p23
      %p30 = scmp.eq.s32.totalorder %s14, 1
      %p31 = por %p29, %p30
      %p32 = scmp.ne.s32.totalorder %s24, %s27
      %p33 = scmp.eq.s32.totalorder %s14, 0
      %p34 = por %p32, %p33
      %p35 = scmp.ne.s32.totalorder %s24, %s27
      %p36 = scmp.eq.s32.totalorder %s19, 1
      %p37 = por %p35, %p36
      %p38 = scmp.ne.s32.totalorder %s27, %s28
      %p39 = scmp.eq.s32.totalorder %s19, 0
      %p40 = por %p38, %p39
      %p41 = scmp.ne.s32.totalorder %s27, %s28
      %p42 = scmp.eq.s32.totalorder %s20, 1
      %p43 = por %p41, %p42
      %p45 = scmp.ne.s32.totalorder %s28, %s44
      %p46 = scmp.eq.s32.totalorder %s20, 0
      %p47 = por %p45, %p46
      %s49 = sadd.s32 %s48, 1
      %p52 = scmp.eq.s32.totalorder %s14, 1
      %p53 = scmp.ne.s32.totalorder %s48, %s50
      %p54 = scmp.eq.s32.totalorder %s14, 0
      %p55 = por %p53, %p54
      %p56 = scmp.ne.s32.totalorder %s48, %s50
      %p57 = scmp.eq.s32.totalorder %s19, 1
      %p58 = por %p56, %p57
      %p59 = scmp.ne.s32.totalorder %s50, %s51
      %p60 = scmp.eq.s32.totalorder %s19, 0
      %p61 = por %p59, %p60
      %p62 = scmp.ne.s32.totalorder %s50, %s51
      %p63 = scmp.eq.s32.totalorder %s20, 1
      %p64 = por %p62, %p63
      %p66 = scmp.ne.s32.totalorder %s51, %s65
      %p67 = scmp.eq.s32.totalorder %s20, 0
      %p68 = por %p66, %p67
      %s70 = sadd.s32 %s69, 1
      %p73 = scmp.eq.s32.totalorder %s14, 1
      %p74 = scmp.ne.s32.totalorder %s69, %s71
      %p75 = scmp.eq.s32.totalorder %s14, 0
      %p76 = por %p74, %p75
      %p77 = scmp.ne.s32.totalorder %s69, %s71
      %p78 = scmp.eq.s32.totalorder %s19, 1
      %p79 = por %p77, %p78
      %p80 = scmp.ne.s32.totalorder %s71, %s72
      %p81 = scmp.eq.s32.totalorder %s19, 0
      %p82 = por %p80, %p81
      %p83 = scmp.ne.s32.totalorder %s71, %s72
      %p84 = scmp.eq.s32.totalorder %s20, 1
      %p85 = por %p83, %p84
      %p87 = scmp.ne.s32.totalorder %s72, %s86
      %p88 = scmp.eq.s32.totalorder %s20, 0
      %p89 = por %p87, %p88
      %s91 = sadd.s32 %s90, 1
      %p94 = scmp.eq.s32.totalorder %s14, 1
      %p95 = scmp.ne.s32.totalorder %s90, %s92
      %p96 = scmp.eq.s32.totalorder %s14, 0
      %p97 = por %p95, %p96
      %p98 = scmp.ne.s32.totalorder %s90, %s92
      %p99 = scmp.eq.s32.totalorder %s19, 1
      %p100 = por %p98, %p99
      %p101 = scmp.ne.s32.totalorder %s92, %s93
      %p102 = scmp.eq.s32.totalorder %s19, 0
      %p103 = por %p101, %p102
      %p104 = scmp.ne.s32.totalorder %s92, %s93
      %p105 = scmp.eq.s32.totalorder %s20, 1
      %p106 = por %p104, %p105
      %p108 = scmp.ne.s32.totalorder %s93, %s107
      %p109 = scmp.eq.s32.totalorder %s20, 0
      %p110 = por %p108, %p109
      %s112 = sadd.s32 %s111, 1
      %p115 = scmp.eq.s32.totalorder %s14, 1
      %p116 = scmp.ne.s32.totalorder %s111, %s113
      %p117 = scmp.eq.s32.totalorder %s14, 0
      %p118 = por %p116, %p117
      %p119 = scmp.ne.s32.totalorder %s111, %s113
      %p120 = scmp.eq.s32.totalorder %s19, 1
      %p121 = por %p119, %p120
      %p122 = scmp.ne.s32.totalorder %s113, %s114
      %p123 = scmp.eq.s32.totalorder %s19, 0
      %p124 = por %p122, %p123
      %p125 = scmp.ne.s32.totalorder %s113, %s114
      %p126 = scmp.eq.s32.totalorder %s20, 1
      %p127 = por %p125, %p126
      %p129 = scmp.ne.s32.totalorder %s114, %s128
      %p130 = scmp.eq.s32.totalorder %s20, 0
      %p131 = por %p129, %p130
      %s132 = ssub.s32 %s14, %s21
      %p133 = scmp.eq.s32.totalorder %s132, 0
      %s135 = sadd.s32 %s134, 1
      %s136 = scalar_select %p133, %s134, %s135
      %p139 = pneg %p133
      %p140 = scmp.eq.s32.totalorder %s14, 1
      %p141 = por %p139, %p140
      %p142 = scmp.ne.s32.totalorder %s134, %s137
      %p143 = scmp.eq.s32.totalorder %s14, 0
      %p144 = por %p142, %p143
      %p145 = scmp.ne.s32.totalorder %s134, %s137
      %p146 = scmp.eq.s32.totalorder %s19, 1
      %p147 = por %p145, %p146
      %p148 = scmp.ne.s32.totalorder %s137, %s138
      %p149 = scmp.eq.s32.totalorder %s19, 0
      %p150 = por %p148, %p149
      %p151 = scmp.ne.s32.totalorder %s137, %s138
      %p152 = scmp.eq.s32.totalorder %s20, 1
      %p153 = por %p151, %p152
      %p155 = scmp.ne.s32.totalorder %s138, %s154
      %p156 = scmp.eq.s32.totalorder %s20, 0
      %p157 = por %p155, %p156
      %p158 = scmp.le.s32.totalorder 1, %s14
      %p159 = scmp.lt.s32.totalorder %s14, 3
      %p160 = pnand %p158, %p159
      %p161 = pneg %p160
      // Predicated region
      $region9: #{tpu_custom_call.1} parent=5 // pred_check
        _
      $region10: #{tpu_custom_call.1} parent=5 // pred_check_branch
        %163 = sbr.rel (%p160) target = $region12
      $region11: #{tpu_custom_call.1} parent=5 // pred_region
        %s164 = ssub.s32 %s14, 1
        // Predicated region
        $region13: #{tpu_custom_call.1} parent=11 // pred_check
          %p165 = pneg %p61
        $region14: #{tpu_custom_call.1} parent=11 // pred_check_branch
          %167 = sbr.rel (%p165) target = $region16
        $region15: #{tpu_custom_call.1} parent=11 // pred_region
          _
        $region16: #{tpu_custom_call.1} parent=11 // pred_fallthru
          _
        // Predicated region
        $region17: #{tpu_custom_call.1} parent=11 // pred_check
          %p168 = pneg %p82
        $region18: #{tpu_custom_call.1} parent=11 // pred_check_branch
          %170 = sbr.rel (%p168) target = $region20
        $region19: #{tpu_custom_call.1} parent=11 // pred_region
          _
        $region20: #{tpu_custom_call.1} parent=11 // pred_fallthru
          _
        // Predicated region
        $region21: #{tpu_custom_call.1} parent=11 // pred_check
          %p171 = pneg %p103
        $region22: #{tpu_custom_call.1} parent=11 // pred_check_branch
          %173 = sbr.rel (%p171) target = $region24
        $region23: #{tpu_custom_call.1} parent=11 // pred_region
          _
        $region24: #{tpu_custom_call.1} parent=11 // pred_fallthru
          _
        // Predicated region
        $region25: #{tpu_custom_call.1} parent=11 // pred_check
          %p174 = pneg %p124
        $region26: #{tpu_custom_call.1} parent=11 // pred_check_branch
          %176 = sbr.rel (%p174) target = $region28
        $region27: #{tpu_custom_call.1} parent=11 // pred_region
          _
        $region28: #{tpu_custom_call.1} parent=11 // pred_fallthru
          _
      $region12: #{tpu_custom_call.1} parent=5 // pred_fallthru
        _
      %p177 = scmp.lt.s32.totalorder %s14, 2
      // Predicated region
      $region29: #{tpu_custom_call.1} parent=5 // pred_check
        %p178 = pneg %p177
      $region30: #{tpu_custom_call.1} parent=5 // pred_check_branch
        %180 = sbr.rel (%p178) target = $region32
      $region31: #{tpu_custom_call.1} parent=5 // pred_region
        // Predicated region
        $region33: #{tpu_custom_call.1} parent=31 // pred_check
          %p181 = pneg %p34
        $region34: #{tpu_custom_call.1} parent=31 // pred_check_branch
          %183 = sbr.rel (%p181) target = $region36
        $region35: #{tpu_custom_call.1} parent=31 // pred_region
          %s184 = smul.u32 2, %s14
          %p185 = scmp.lt.s32.totalorder %s184, 3
          %s186 = scalar_select %p185, %s184, 3
          %s187 = smul.addr %s186, 8
          %s188 = scalar_lea.vmem %s0, %s187
          %s189 = smul.u32 2, %s14
        $region36: #{tpu_custom_call.1} parent=31 // pred_fallthru
          _
      $region32: #{tpu_custom_call.1} parent=5 // pred_fallthru
        _
      %p190 = scmp.le.s32.totalorder 1, %s14
      %p191 = scmp.lt.s32.totalorder %s14, 3
      %p192 = pnand %p190, %p191
      %p193 = pneg %p192
      // Predicated region
      $region37: #{tpu_custom_call.1} parent=5 // pred_check
        _
      $region38: #{tpu_custom_call.1} parent=5 // pred_check_branch
        %195 = sbr.rel (%p192) target = $region40
      $region39: #{tpu_custom_call.1} parent=5 // pred_region
        %s196 = ssub.s32 %s14, 1
        %s197 = smul.u32 2, %s19
        %p198 = scmp.lt.s32.totalorder %s197, 3
        %s199 = scalar_select %p198, %s197, 3
        %s200 = smul.addr %s199, 8
        %s201 = scalar_lea.vmem %s0, %s200
        %p202 = pneg %p40
        %p203 = pneg %p37
        %p204 = pneg %p61
        %p205 = pneg %p58
        %p206 = pneg %p82
        %p207 = pneg %p79
        %p208 = pneg %p103
        %p209 = pneg %p100
        %p210 = pneg %p124
        %p211 = pneg %p121
        %p212 = pneg %p150
        %p213 = pneg %p147
        %s214 = sand.u32 %s137, 1
        %s215 = scalar_lea.sflag [#allocation3], %s214
        %s216 = sand.u32 %s137, 1
        %s217 = smul.addr %s216, 16
        %s218 = scalar_lea.vmem [#allocation2], %s217
        %s219 = smul.u32 2, %s19
        %p220 = scmp.lt.s32.totalorder %s219, 3
        %s221 = scalar_select %p220, %s219, 3
        %s222 = smul.addr %s221, 8
        %s223 = scalar_lea.vmem %s0, %s222
        %s224 = smul.u32 2, %s19
        %s225 = smul.u32 2, %s19
        %v226 = vld [vmem:[%s223] sm:$0xff]
        %v227 = vld [vmem:[%s223 + $0x8] sm:$0xff]
        %v228 = vld [vmem:[%s1] sm:$0xff]
        %v229 = vld [vmem:[%s1 + $0x8] sm:$0xff]
        %v230 = vld [vmem:[%s1 + $0x10] sm:$0xff]
        %v231 = vld [vmem:[%s1 + $0x18] sm:$0xff]
        %v232 = vld [vmem:[%s1 + $0x20] sm:$0xff]
        %v233 = vld [vmem:[%s1 + $0x28] sm:$0xff]
        %v234 = vld [vmem:[%s1 + $0x30] sm:$0xff]
        %v235 = vld [vmem:[%s1 + $0x38] sm:$0xff]
        %v236 = vld [vmem:[%s3] sm:$0xff]
        %v237 = vld [vmem:[%s3 + $0x8] sm:$0xff]
        %v238 = vld [vmem:[%s3 + $0x10] sm:$0xff]
        %v239 = vld [vmem:[%s3 + $0x18] sm:$0xff]
        %v240 = vld [vmem:[%s2] sm:$0x1]
        %v242 = vlaneseq
        %v243 = vshrl.u32 %v242, 7
        %v244 = vsub.s32 0, %v243
        %v245 = vrot.slane %v240, %v244
        %vm247 = vcmask 523264
        %v249 = vsel %vm247, %v226, 0
        %v252 = vsel %vm247, %v227, 0
        %254 = vmatprep.subr.mxu0 0.0
        %255 = vmatpush1.msra.mxu0 0.0
        %256 = vmatprep.subr.mxu0 0.0
        %257 = vmatpush1.msra.mxu0 0.0
        %258 = vmatprep.subr.mxu0 0.0
        %259 = vmatpush1.msra.mxu0 0.0
        %260 = vmatprep.subr.mxu0 0.0
        %261 = vmatpush1.msra.mxu0 0.0
        %262 = vmatprep.subr.mxu0 0.0
        %263 = vmatpush1.msra.mxu0 0.0
        %264 = vmatprep.subr.mxu0 0.0
        %265 = vmatpush1.msra.mxu0 0.0
        %266 = vmatprep.subr.mxu0 0.0
        %267 = vmatpush1.msra.mxu0 0.0
        %268 = vmatprep.subr.mxu0 0.0
        %269 = vmatpush1.msra.mxu0 0.0
        %270 = vmatprep.subr.mxu0 0.0
        %271 = vmatpush1.msra.mxu0 %v235
        %272 = vmatprep.subr.mxu0 0.0
        %273 = vmatpush1.msra.mxu0 %v234
        %274 = vmatprep.subr.mxu0 0.0
        %275 = vmatpush1.msra.mxu0 %v233
        %276 = vmatprep.subr.mxu0 0.0
        %277 = vmatpush1.msra.mxu0 %v232
        %278 = vmatprep.subr.mxu0 0.0
        %279 = vmatpush1.msra.mxu0 %v231
        %280 = vmatprep.subr.mxu0 0.0
        %281 = vmatpush1.msra.mxu0 %v230
        %282 = vmatprep.subr.mxu0 0.0
        %283 = vmatpush1.msra.mxu0 %v229
        %284 = vmatprep.subr.mxu0 0.0
        %285 = vmatpush1.msra.mxu0 %v228
        %286 = vmatprep.subr.mxu0 0.0
        %287 = vmatpush2.msra.mxu0 0.0
        %288 = vmatprep.subr.mxu0 0.0
        %289 = vmatpush2.msra.mxu0 0.0
        %290 = vmatprep.subr.mxu0 0.0
        %291 = vmatpush2.msra.mxu0 0.0
        %292 = vmatprep.subr.mxu0 0.0
        %293 = vmatpush2.msra.mxu0 0.0
        %294 = vmatprep.subr.mxu0 0.0
        %295 = vmatpush2.msra.mxu0 0.0
        %296 = vmatprep.subr.mxu0 0.0
        %297 = vmatpush2.msra.mxu0 0.0
        %298 = vmatprep.subr.mxu0 0.0
        %299 = vmatpush2.msra.mxu0 0.0
        %300 = vmatprep.subr.mxu0 0.0
        %301 = vmatpush2.msra.mxu0 0.0
        %302 = vmatprep.subr.mxu0 0.0
        %303 = vmatpush2.msra.mxu0 0.0
        %304 = vmatprep.subr.mxu0 0.0
        %305 = vmatpush2.msra.mxu0 0.0
        %306 = vmatprep.subr.mxu0 0.0
        %307 = vmatpush2.msra.mxu0 0.0
        %308 = vmatprep.subr.mxu0 0.0
        %309 = vmatpush2.msra.mxu0 0.0
        %310 = vmatprep.subr.mxu0 0.0
        %311 = vmatpush2.msra.mxu0 0.0
        %312 = vmatprep.subr.mxu0 0.0
        %313 = vmatpush2.msra.mxu0 0.0
        %314 = vmatprep.subr.mxu0 0.0
        %315 = vmatpush2.msra.mxu0 0.0
        %316 = vmatprep.subr.mxu0 0.0
        %317 = vmatpush2.msra.mxu0 0.0
        %318 = vmatprep.mubr.f32.mxu0 0.0
        %319 = vmatmul.mubr.f32.gmra.mxu0 %v249
        %v320 = vpop.f32.mrf.mxu0
        %v321 = vadd.f32 %v245, %v320
        %v322 = vpop.f32.mrf.mxu0
        %323 = vmatprep.mubr.f32.mxu0 0.0
        %324 = vmatmul.mubr.f32.gmra.mxu0 %v252
        %v325 = vpop.f32.mrf.mxu0
        %v326 = vadd.f32 %v245, %v325
        %v327 = vpop.f32.mrf.mxu0
        %328 = vdwg.mxu0
        %v329 = vmul.f32 %v321, 0.5
        %v330 = vmul.f32 %v326, 0.5
        %v331 = vmul.f32 %v321, 0.70710677
        %v332 = vmul.f32 %v326, 0.70710677
        %v333 = verf.f32.pop %v331
        %v334 = verf.f32.pop %v332
        %v335 = vadd.f32 %v333, 1.0
        %v336 = vadd.f32 %v334, 1.0
        %v337 = vmul.f32 %v329, %v335
        %v338 = vmul.f32 %v330, %v336
        %v339 = vld [vmem:[%s4] sm:$0x1]
        %v341 = vlaneseq
        %v342 = vshrl.u32 %v341, 7
        %v343 = vsub.s32 0, %v342
        %v344 = vrot.slane %v339, %v343
        %vm346 = vcmask 261120
        %v348 = vsel %vm346, %v337, 0
        %v351 = vsel %vm346, %v338, 0
        %353 = vmatprep.subr.mxu0 0.0
        %354 = vmatpush1.msra.mxu0 0.0
        %355 = vmatprep.subr.mxu0 0.0
        %356 = vmatpush1.msra.mxu0 0.0
        %357 = vmatprep.subr.mxu0 0.0
        %358 = vmatpush1.msra.mxu0 0.0
        %359 = vmatprep.subr.mxu0 0.0
        %360 = vmatpush1.msra.mxu0 0.0
        %361 = vmatprep.subr.mxu0 0.0
        %362 = vmatpush1.msra.mxu0 0.0
        %363 = vmatprep.subr.mxu0 0.0
        %364 = vmatpush1.msra.mxu0 0.0
        %365 = vmatprep.subr.mxu0 0.0
        %366 = vmatpush1.msra.mxu0 0.0
        %367 = vmatprep.subr.mxu0 0.0
        %368 = vmatpush1.msra.mxu0 0.0
        %369 = vmatprep.subr.mxu0 0.0
        %370 = vmatpush1.msra.mxu0 0.0
        %371 = vmatprep.subr.mxu0 0.0
        %372 = vmatpush1.msra.mxu0 0.0
        %373 = vmatprep.subr.mxu0 0.0
        %374 = vmatpush1.msra.mxu0 0.0
        %375 = vmatprep.subr.mxu0 0.0
        %376 = vmatpush1.msra.mxu0 0.0
        %377 = vmatprep.subr.mxu0 0.0
        %378 = vmatpush1.msra.mxu0 %v239
        %379 = vmatprep.subr.mxu0 0.0
        %380 = vmatpush1.msra.mxu0 %v238
        %381 = vmatprep.subr.mxu0 0.0
        %382 = vmatpush1.msra.mxu0 %v237
        %383 = vmatprep.subr.mxu0 0.0
        %384 = vmatpush1.msra.mxu0 %v236
        %385 = vmatprep.subr.mxu0 0.0
        %386 = vmatpush2.msra.mxu0 0.0
        %387 = vmatprep.subr.mxu0 0.0
        %388 = vmatpush2.msra.mxu0 0.0
        %389 = vmatprep.subr.mxu0 0.0
        %390 = vmatpush2.msra.mxu0 0.0
        %391 = vmatprep.subr.mxu0 0.0
        %392 = vmatpush2.msra.mxu0 0.0
        %393 = vmatprep.subr.mxu0 0.0
        %394 = vmatpush2.msra.mxu0 0.0
        %395 = vmatprep.subr.mxu0 0.0
        %396 = vmatpush2.msra.mxu0 0.0
        %397 = vmatprep.subr.mxu0 0.0
        %398 = vmatpush2.msra.mxu0 0.0
        %399 = vmatprep.subr.mxu0 0.0
        %400 = vmatpush2.msra.mxu0 0.0
        %401 = vmatprep.subr.mxu0 0.0
        %402 = vmatpush2.msra.mxu0 0.0
        %403 = vmatprep.subr.mxu0 0.0
        %404 = vmatpush2.msra.mxu0 0.0
        %405 = vmatprep.subr.mxu0 0.0
        %406 = vmatpush2.msra.mxu0 0.0
        %407 = vmatprep.subr.mxu0 0.0
        %408 = vmatpush2.msra.mxu0 0.0
        %409 = vmatprep.subr.mxu0 0.0
        %410 = vmatpush2.msra.mxu0 0.0
        %411 = vmatprep.subr.mxu0 0.0
        %412 = vmatpush2.msra.mxu0 0.0
        %413 = vmatprep.subr.mxu0 0.0
        %414 = vmatpush2.msra.mxu0 0.0
        %415 = vmatprep.subr.mxu0 0.0
        %416 = vmatpush2.msra.mxu0 0.0
        %417 = vmatprep.mubr.f32.mxu0 0.0
        %418 = vmatmul.mubr.f32.gmra.mxu0 %v348
        %v419 = vpop.f32.mrf.mxu0
        %v420 = vadd.f32 %v344, %v419
        %v421 = vpop.f32.mrf.mxu0
        %422 = vmatprep.mubr.f32.mxu0 0.0
        %423 = vmatmul.mubr.f32.gmra.mxu0 %v351
        %v424 = vpop.f32.mrf.mxu0
        %v425 = vadd.f32 %v344, %v424
        %v426 = vpop.f32.mrf.mxu0
        %427 = vdwg.mxu0
        %428 = vst.msk [vmem:[%s218] sm:$0xff] %vm346, %v420
        %429 = vst.msk [vmem:[%s218 + $0x8] sm:$0xff] %vm346, %v425
        %s430 = sand.u32 %s137, 1
        %s431 = scalar_lea.sflag [#allocation3], %s430
        %s432 = sand.u32 %s137, 1
        %s433 = smul.addr %s432, 16
        %s434 = scalar_lea.vmem [#allocation2], %s433
        // Predicated region
        $region41: #{tpu_custom_call.1} parent=39 // pred_check
          %p435 = pneg %p147
        $region42: #{tpu_custom_call.1} parent=39 // pred_check_branch
          %437 = sbr.rel (%p435) target = $region44
        $region43: #{tpu_custom_call.1} parent=39 // pred_region
          %s438 = smul.u32 2, %s19
          %s440 = ssub.s32 256, 256
          %441 = vsyncadd %s431, %s440
          %s442 = smul.addr %s438, 128
          %s443 = scalar_lea.hbm %s5, %s442
          %s444 = sshll.u32 %s434, 4
          %s445 = int_to_ptr.vmem [resolvable:$true] %s444
          %450 = dma.vmem_to_hbm [thread:$0]  %s445, 256, %s443, %s431, 128, 128, 8
        $region44: #{tpu_custom_call.1} parent=39 // pred_fallthru
          _
      $region40: #{tpu_custom_call.1} parent=5 // pred_fallthru
        _
      %p451 = scmp.le.s32.totalorder 2, %s14
      // Predicated region
      $region45: #{tpu_custom_call.1} parent=5 // pred_check
        %p452 = pneg %p451
      $region46: #{tpu_custom_call.1} parent=5 // pred_check_branch
        %454 = sbr.rel (%p452) target = $region48
      $region47: #{tpu_custom_call.1} parent=5 // pred_region
        %s455 = ssub.s32 %s14, 2
        // Predicated region
        $region49: #{tpu_custom_call.1} parent=47 // pred_check
          %p456 = pneg %p153
        $region50: #{tpu_custom_call.1} parent=47 // pred_check_branch
          %458 = sbr.rel (%p456) target = $region52
        $region51: #{tpu_custom_call.1} parent=47 // pred_region
          %s459 = sand.u32 %s138, 1
          %s460 = scalar_lea.sflag [#allocation3], %s459
          %s461 = sand.u32 %s138, 1
          %s462 = smul.addr %s461, 16
          %s463 = scalar_lea.vmem [#allocation2], %s462
          %464 = dma.done %s460, 256
        $region52: #{tpu_custom_call.1} parent=47 // pred_fallthru
          _
      $region48: #{tpu_custom_call.1} parent=5 // pred_fallthru
        _
    $region6: #{tpu_custom_call.1} parent=1 // loop_footer
      %s18 = sadd.s32 1, %s14
    $region7: #{tpu_custom_call.1} parent=1 // loop_footer_branch
      %13 = sbr.rel target = $region3
    $region8: #{tpu_custom_call.1} parent=1 // loop_exit
      _
    %465 = vsyncpa [#allocation3], 1
    %s466 = scalar_lea.sflag [#allocation3], 1
    %467 = vsyncpa %s466, 1

</llo_original>
